<compile_context>
chip_gen: v7x
topology: tpu7x:2x2x1
jax: 0.10.0
libtpu: 0.0.40
codegen_flags: <defaults>
</compile_context>

<pallas_src>
import jax
import jax.numpy as jnp
from jax.experimental import pallas as pl
from jax.experimental.pallas import tpu as pltpu


def _relu_kernel(x_ref, o_ref):
    # One vmax per vreg on the VPU; scalar 0 stays weakly typed so the input
    # dtype (float, bf16, int, ...) is preserved, matching torch.relu().
    o_ref[...] = jnp.maximum(x_ref[...], 0)


def _target_block_bytes() -> int:
    """Generation-dependent streaming block size (DMA/HBM is the only lever)."""
    try:
        kind = jax.devices()[0].device_kind.lower()
    except Exception:  # defensive: never let tuning break correctness
        kind = ""
    if "v7" in kind or "7x" in kind:
        # v7x: ~3.2 TB/s per TC -> a 2 MiB block is only ~1.25 us of DMA per
        # grid step, so the ~0.35 us step overhead would leak. 4 MiB blocks x
        # (in + out) x 2 buffers = 16 MiB fits the default 32 MiB scoped VMEM
        # (64 MiB physical) without raising vmem_limit_bytes.
        return 4 * 1024 * 1024
    # v5e (16 MiB scoped default) / v6e: 2 MiB x 4 buffers = 8 MiB; measured
    # streaming data on v6e is already ~85% of roofline at ~1 MiB tiles, so
    # bigger blocks or deeper buffering only burn VMEM.
    return 2 * 1024 * 1024


def _choose_layout(n: int, itemsize: int):
    """Pick a lane-dense 2D factorization (lane, rows) of the flat vector."""
    # dtype-aware sublane packing: f32/i32 -> 8, bf16/f16 -> 16, int8/fp8 -> 32
    sub = {4: 8, 2: 16, 1: 32}.get(itemsize, 8)
    # Widest lane dim (multiple of 128) dividing n exactly while leaving at
    # least one full packed sublane tile worth of rows.
    for cand in (2048, 1024, 512, 256, 128):
        if n % cand == 0 and (n // cand) >= sub:
            return cand, n // cand, sub
    for cand in (2048, 1024, 512, 256, 128):
        if n % cand == 0:
            return cand, n // cand, sub
    return None, None, sub  # ragged: no clean 128-lane factorization


# Below this size the fixed pallas_call / custom-call boundary costs dominate
# and a bare jnp.maximum fuses into neighboring XLA ops.
_MIN_PALLAS_BYTES = 2 * 1024 * 1024


def relu_pallas(x: jax.Array, *, force_pallas: bool = False,
                donate: bool = False) -> jax.Array:
    """ReLU(x): same shape/dtype as input (forward of the ReLU module)."""
    orig_shape = x.shape
    dtype = x.dtype
    n = x.size
    itemsize = jnp.dtype(dtype).itemsize

    # Small-input fast path: an unfusable custom call can only lose here.
    if n == 0 or (not force_pallas and n * itemsize < _MIN_PALLAS_BYTES):
        return jnp.maximum(x, 0)

    lane, rows, sub = _choose_layout(n, itemsize)
    if lane is None:
        # Ragged element count (n % 128 != 0): padding before the kernel and
        # slicing the tail after it would each add a full extra HBM pass on a
        # purely bandwidth-bound op (~2-3x traffic). Let fused XLA handle it.
        return jnp.maximum(x, 0)

    block_bytes = _target_block_bytes()
    tile_r = max(sub, (block_bytes // (lane * itemsize)) // sub * sub)

    # Make sure the grid has several steps: a 1-block grid on v7x leaves one
    # of the two TensorCores (each with its own HBM path) idle, and >=4 steps
    # lets the pipeline overlap writeback with the next prefetch.
    min_grid_steps = 4
    split_tile = pl.cdiv(pl.cdiv(rows, min_grid_steps), sub) * sub
    if sub <= split_tile < rows:
        tile_r = min(tile_r, split_tile)
    tile_r = min(tile_r, rows)  # small forced inputs: one block == whole slab

    x2d = jnp.ravel(x).reshape(rows, lane)
    grid = (pl.cdiv(rows, tile_r),)  # partial last block is masked by Pallas

    out2d = pl.pallas_call(
        _relu_kernel,
        out_shape=jax.ShapeDtypeStruct((rows, lane), dtype),
        grid_spec=pltpu.PrefetchScalarGridSpec(
            num_scalar_prefetch=0,
            grid=grid,
            # Default Buffered(2) is enough: contiguous slabs, DMA-bound.
            in_specs=[pl.BlockSpec((tile_r, lane), lambda i: (i, 0))],
            out_specs=pl.BlockSpec((tile_r, lane), lambda i: (i, 0)),
        ),
        compiler_params=pltpu.CompilerParams(
            # Row axis is embarrassingly parallel: lets v7x shard the grid
            # across its 2 TensorCores; no-op on single-core v5e/v6e.
            dimension_semantics=("parallel",),
        ),
        # Tell XLA this is a known bandwidth-bound op so it schedules the
        # surrounding graph around it.
        cost_estimate=pl.CostEstimate(
            flops=n, transcendentals=0, bytes_accessed=2 * n * itemsize),
        # Optional in-place (relu_-style) when the caller donates x: saves the
        # output HBM allocation / peak memory (not DMA bytes).
        input_output_aliases=({0: 0} if donate else {}),
    )(x2d)

    return out2d.reshape(orig_shape)


if __name__ == "__main__":
    key = jax.random.PRNGKey(0)
    k1, k2 = jax.random.split(key)

    # Small NCHW activation, as the ReLU module would see inside a CNN.
    x_small = jax.random.normal(k1, (2, 4, 16, 16), dtype=jnp.float32)
    # Bandwidth-sized activation that takes the Pallas streaming path with a
    # multi-step parallel grid.
    x_large = jax.random.normal(k2, (4, 32, 64, 64), dtype=jnp.float32)

    # 1) Wrapper on the module-sized input (small-input fused fast path).
    y_small = relu_pallas(x_small)
    # 2) Force the Pallas kernel on the same small input (single-block grid).
    y_small_k = relu_pallas(x_small, force_pallas=True)
    # 3) Default path on the larger input (multi-step "parallel" grid).
    y_large = relu_pallas(x_large)
    jax.block_until_ready((y_small, y_small_k, y_large))

    for x, y in ((x_small, y_small), (x_small, y_small_k), (x_large, y_large)):
        y_ref = jnp.maximum(x, 0.0)
        assert y.shape == x.shape and y.dtype == x.dtype
        assert jnp.allclose(y, y_ref), "ReLU kernel mismatch"

    print("KERNEL_OK")
</pallas_src>

<mosaic_0001>
module attributes {stable_mosaic.version = 11 : i64} {
  func.func @_relu_kernel(%arg0: i32, %arg1: memref<8x256xf32, #tpu.memory_space<vmem>>, %arg2: memref<8x256xf32, #tpu.memory_space<vmem>>) attributes {dimension_semantics = [#tpu.dimension_semantics<parallel>], iteration_bounds = array<i64: 1>, scalar_prefetch = 0 : i64, scratch_operands = 0 : i64, tpu.core_type = #tpu.core_type<tc>, window_params = [{transform_indices = @transform_0, window_bounds = array<i64: 8, 256>}, {transform_indices = @transform_1, window_bounds = array<i64: 8, 256>}]} {
    %c0 = arith.constant 0 : index
    %c0_0 = arith.constant 0 : index
    %0 = vector.load %arg1[%c0, %c0_0] : memref<8x256xf32, #tpu.memory_space<vmem>>, vector<8x256xf32>
    %cst = arith.constant 0.000000e+00 : f32
    %1 = vector.broadcast %cst : f32 to vector<8x256xf32>
    %2 = arith.maximumf %0, %1 : vector<8x256xf32>
    %c0_1 = arith.constant 0 : index
    %c0_2 = arith.constant 0 : index
    %3 = vector.load %arg2[%c0_1, %c0_2] : memref<8x256xf32, #tpu.memory_space<vmem>>, vector<8x256xf32>
    tpu.vector_store %arg2[%c0_1, %c0_2], %2 {strides = array<i32>} : memref<8x256xf32, #tpu.memory_space<vmem>>, vector<8x256xf32>,
    return
  }
  func.func @transform_0(%arg0: i32) -> (i32, i32) {
    %c0_i32 = arith.constant 0 : i32
    %c0_i32_0 = arith.constant 0 : i32
    return %arg0, %c0_i32 : i32, i32
  }
  func.func @transform_1(%arg0: i32) -> (i32, i32) {
    %c0_i32 = arith.constant 0 : i32
    %c0_i32_0 = arith.constant 0 : i32
    return %arg0, %c0_i32 : i32, i32
  }
}

</mosaic_0001>

<llo_original>
// kernel: tpu_custom_call.1
$region0: #{tpu_custom_call.1}
  #allocation0 [shape = 'u32[]', space=smem, size = 0x4, offset = 0x4, fixed_abs, tag = 'smem constant byte address 0x4 - core index']
  #allocation1 [shape = 'u32[144,128]{1,0:T(1,128)}', space=vmem, size = 0x12000, scoped, tag = 'internal scratch']
  %s0 = inlined_call_operand.hbm [shape: f32[8,256], index: 0, kind: input, shape index: {}]
  %s1 = inlined_call_operand.hbm [shape: f32[8,256], index: 1, kind: output, shape index: {}]
  %s2 = sld [smem:[#allocation0]]
  $region18: #{tpu_custom_call.1} parent=0
    _
  %s4 = ssub.s32 1, %s2
  %s5 = scalar_select 0, %s4, %s2
  $region1: #{tpu_custom_call.1} parent=0
    #allocation2 [shape = 'u8[8192]{0}', space=vmem, size = 0x2000, scoped, tag = 'input window, operand 0, single buffered']
    #allocation3 [shape = 's32[1]{0}', space=sflag, size = 0x4, scoped, tag = 'scoped memory for tpu_custom_call.1']
    #allocation4 [shape = 's32[1]{0}', space=sflag, size = 0x4, scoped, tag = 'scoped memory for tpu_custom_call.1']
    #allocation5 [shape = 'u8[8192]{0}', space=vmem, size = 0x2000, scoped, tag = 'output window, operand 0, single buffered']
    %6 = vsyncpa [#allocation3], 0
    %7 = vsyncpa [#allocation4], 0
    // Predicated region
    $region2: #{tpu_custom_call.1} parent=1 // pred_check
      _
    $region3: #{tpu_custom_call.1} parent=1 // pred_check_branch
      %9 = sbr.rel (0) target = $region5
    $region4: #{tpu_custom_call.1} parent=1 // pred_region
      %s11 = ssub.s32 256, 256
      %12 = vsyncadd [#allocation3], %s11
      %s14 = sshll.u32 [#allocation2], 4
      %s15 = int_to_ptr.vmem [resolvable:$true] %s14
      %17 = dma.hbm_to_vmem [thread:$0]  %s0, 256, %s15, [#allocation3]
    $region5: #{tpu_custom_call.1} parent=1 // pred_fallthru
      _
    // Predicated region
    $region6: #{tpu_custom_call.1} parent=1 // pred_check
      _
    $region7: #{tpu_custom_call.1} parent=1 // pred_check_branch
      %19 = sbr.rel (0) target = $region9
    $region8: #{tpu_custom_call.1} parent=1 // pred_region
      %20 = dma.done [#allocation3], 256
    $region9: #{tpu_custom_call.1} parent=1 // pred_fallthru
      _
    %v21 = vld [vmem:[#allocation2] sm:$0xff]
    %v22 = vld [vmem:[#allocation2 + $0x8] sm:$0xff]
    %v23 = vmax.f32 %v21, 0.0
    %v24 = vmax.f32 %v22, 0.0
    %25 = vst [vmem:[#allocation5] sm:$0xff] %v23
    %26 = vst [vmem:[#allocation5 + $0x8] sm:$0xff] %v24
    // Predicated region
    $region10: #{tpu_custom_call.1} parent=1 // pred_check
      _
    $region11: #{tpu_custom_call.1} parent=1 // pred_check_branch
      %28 = sbr.rel (0) target = $region13
    $region12: #{tpu_custom_call.1} parent=1 // pred_region
      %s30 = ssub.s32 256, 256
      %31 = vsyncadd [#allocation4], %s30
      %s33 = sshll.u32 [#allocation5], 4
      %s34 = int_to_ptr.vmem [resolvable:$true] %s33
      %36 = dma.vmem_to_hbm [thread:$0]  %s34, 256, %s1, [#allocation4]
    $region13: #{tpu_custom_call.1} parent=1 // pred_fallthru
      _
    // Predicated region
    $region14: #{tpu_custom_call.1} parent=1 // pred_check
      _
    $region15: #{tpu_custom_call.1} parent=1 // pred_check_branch
      %38 = sbr.rel (0) target = $region17
    $region16: #{tpu_custom_call.1} parent=1 // pred_region
      %39 = dma.done [#allocation4], 256
    $region17: #{tpu_custom_call.1} parent=1 // pred_fallthru
      _
    %40 = vsyncpa [#allocation3], 1
    %41 = vsyncpa [#allocation4], 1

</llo_original>
